<compile_context>
chip_gen: v7x
topology: tpu7x:2x2x1
jax: 0.10.0
libtpu: 0.0.40
codegen_flags: <defaults>
</compile_context>

<pallas_src>
import functools

import numpy as np
import jax
import jax.numpy as jnp
from jax.experimental import pallas as pl
from jax.experimental.pallas import tpu as pltpu

SLOPE = 0.1  # LeakyReLU negative slope


def _leaky(v):
    return jnp.where(v > 0, v, SLOPE * v)


def _speech_upsample_kernel(
    xw_ref,     # (Cin_p, T_tile+6) f32    input window (3-sample halo each side)
    wbig_ref,   # (2*up*Cp + Cp, 6*Cin_p)  fused transposed-conv + skip weights (phase-major)
    bpm_ref,    # (2*up*Cp, 1) f32         ct3/ct5 biases, phase-major
    wc_ref,     # (Cp, 6*Cp)               fused k=3 'same' conv weights (both branches, /sqrt2)
    bout_ref,   # (Cp, 1) f32              (c3_b + c5_b)/sqrt2 + skip_b
    o_ref,      # (Cp, up*T_tile) f32      phase-blocked output tile
    act_scr,    # (6*Cin_p, T_tile+2)      stacked activation taps + raw input
    zl_scr,     # (2*up*Cp, T_tile+2)      leaky(transposed conv + bias), phase-major
    zcat_scr,   # (6*Cp, up*T_tile)        [z(t-1); z(t); z(t+1)] x [branch3; branch5]
    *, t_tile, up, cin_p, cp):
    tt = t_tile
    tq = tt + 2
    mm = wbig_ref.dtype                     # matmul operand dtype (bf16/f32); accum is f32
    g = pl.program_id(1)
    n_tc = 2 * up * cp
    cc = 2 * cp

    def dot(a, b):
        return jnp.dot(a, b, preferred_element_type=jnp.float32)

    # Stacked-tap activation (+ raw input for the skip), shared by every matmul row group.
    xw = xw_ref[...]                        # (Cin_p, tt+6) f32
    a = _leaky(xw)                          # leaky(0)=0 keeps the halo pads zero
    for j in range(5):                      # tap j uses sample (q + 2 - j)
        act_scr[j * cin_p:(j + 1) * cin_p, :] = a[:, 4 - j:4 - j + tq].astype(mm)
    act_scr[5 * cin_p:6 * cin_p, :] = xw[:, 2:2 + tq].astype(mm)

    # One fused MXU matmul: both transposed convs (phase-major, extended by one step on each
    # side of the tile) and the 1x1 skip conv.
    y = dot(wbig_ref[...], act_scr[...])                        # (2*up*Cp + Cp, tq) f32

    # LeakyReLU + bias, all phases / both branches at once; store to scratch and slice the ref.
    yz = y[:n_tc, :] + bpm_ref[...]
    zl_scr[...] = _leaky(yz).astype(mm)
    y_skip = y[n_tc:, 1:1 + tt]                                 # (Cp, tt) f32; bias in bout

    # Assemble the k=3 'same' conv operand in phase-blocked columns (col = p*tt + q).
    # z(t-1)/z(t+1) are the adjacent phase blocks; the wrap-around phase reads the 1-step halo
    # columns of zl_scr, which is exact across tile seams.
    ctr = [zl_scr[p * cc:(p + 1) * cc, 1:1 + tt] for p in range(up)]
    zcat_scr[cc:2 * cc, :] = jnp.concatenate(ctr, axis=1)                         # z(t)
    zcat_scr[0:cc, :] = jnp.concatenate(
        [zl_scr[(up - 1) * cc:up * cc, 0:tt]] + ctr[:up - 1], axis=1)             # z(t-1)
    zcat_scr[2 * cc:3 * cc, :] = jnp.concatenate(
        ctr[1:] + [zl_scr[0:cc, 2:2 + tt]], axis=1)                               # z(t+1)

    # True sequence edges: z(-1) and z(up*T) are zero ('same' padding of the k=3 conv).
    @pl.when(g == 0)
    def _():
        zcat_scr[0:cc, 0:1] = jnp.zeros((cc, 1), mm)

    @pl.when(g == pl.num_programs(1) - 1)
    def _():
        zcat_scr[2 * cc:3 * cc, up * tt - 1:up * tt] = jnp.zeros((cc, 1), mm)

    # Fused k=3 convs (both branches), nearest-neighbour skip broadcast, folded biases,
    # single lane-dense full-width store.
    res = dot(wc_ref[...], zcat_scr[...])                       # (Cp, up*tt) f32
    skip = jnp.concatenate([y_skip] * up, axis=1)               # (Cp, up*tt) phase-blocked
    o_ref[...] = (res + skip + bout_ref[...]).astype(o_ref.dtype)


def pack_params(params, *, cin, cout, up, groups, mm_dtype=jnp.bfloat16, pad_to=8):
    """Host-side repack of PyTorch-layout parameters into fused, channel-padded operands."""
    def rup(c):
        return max(pad_to, -(-c // pad_to) * pad_to)

    cin_p, cp = rup(cin), rup(cout)
    inv_s2 = 1.0 / np.sqrt(2.0)

    def densify(w):                    # grouped (Cin, Cout//g, K) -> dense (Cin, Cout, K)
        w = np.asarray(w, np.float32)
        K = w.shape[-1]
        ipg, opg = cin // groups, cout // groups
        wd = np.zeros((cin, cout, K), np.float32)
        wblk = w.reshape(groups, ipg, opg, K)
        for gg in range(groups):
            wd[gg * ipg:(gg + 1) * ipg, gg * opg:(gg + 1) * opg, :] = wblk[gg]
        return wd

    w3 = densify(params["ct3_w"]).reshape(cin, cout, 3, up)     # [ci, co, j, p], k = j*up + p
    w5 = densify(params["ct5_w"]).reshape(cin, cout, 5, up)
    wsk = np.asarray(params["skip_w"], np.float32)[:, :, 0]     # (cout, cin)

    # Fused transposed-conv + skip weights: rows = [phase 0: b3|b5, ..., phase up-1: b3|b5, skip],
    # K = 6 stacked-activation blocks of Cin_p (5 taps + raw input).
    M = 2 * up * cp + cp
    w_big = np.zeros((M, 6 * cin_p), np.float32)
    for p in range(up):
        r3 = p * 2 * cp
        r5 = r3 + cp
        for j in range(3):             # branch-3 tap j uses activation block j+1 (a[q+1-j])
            w_big[r3:r3 + cout, (j + 1) * cin_p:(j + 1) * cin_p + cin] = w3[:, :, j, p].T
        for j in range(5):             # branch-5 tap j uses activation block j (a[q+2-j])
            w_big[r5:r5 + cout, j * cin_p:j * cin_p + cin] = w5[:, :, j, p].T
    w_big[2 * up * cp:2 * up * cp + cout, 5 * cin_p:5 * cin_p + cin] = wsk

    # Phase-major ct3/ct5 biases (applied before the inner LeakyReLU).
    b_pm = np.zeros((2 * up * cp, 1), np.float32)
    ct3_b = np.asarray(params["ct3_b"], np.float32)
    ct5_b = np.asarray(params["ct5_b"], np.float32)
    for p in range(up):
        b_pm[p * 2 * cp:p * 2 * cp + cout, 0] = ct3_b
        b_pm[p * 2 * cp + cp:p * 2 * cp + cp + cout, 0] = ct5_b

    # Fused k=3 conv weights for both branches, 1/sqrt(2) folded in.  K blocks of Cp:
    # [b3 tap(t-1) | b5 tap(t-1) | b3 tap(t) | b5 tap(t) | b3 tap(t+1) | b5 tap(t+1)].
    wc3 = np.asarray(params["c3_w"], np.float32)
    wc5 = np.asarray(params["c5_w"], np.float32)
    w_c = np.zeros((cp, 6 * cp), np.float32)
    for k in range(3):
        w_c[:cout, (2 * k) * cp:(2 * k) * cp + cout] = wc3[:, :, k] * inv_s2
        w_c[:cout, (2 * k + 1) * cp:(2 * k + 1) * cp + cout] = wc5[:, :, k] * inv_s2

    # Folded output bias: (c3_b + c5_b)/sqrt(2) + skip_b.
    b_out = np.zeros((cp, 1), np.float32)
    b_out[:cout, 0] = ((np.asarray(params["c3_b"], np.float32)
                        + np.asarray(params["c5_b"], np.float32)) * inv_s2
                       + np.asarray(params["skip_b"], np.float32))

    return {
        "w_big": jnp.asarray(w_big, mm_dtype),
        "b_pm": jnp.asarray(b_pm, jnp.float32),
        "w_c": jnp.asarray(w_c, mm_dtype),
        "b_out": jnp.asarray(b_out, jnp.float32),
        "cin": cin, "cin_p": cin_p, "cout": cout, "cp": cp, "up": up,
    }


def speech_upsample_block(x, packed, *, t_tile=None):
    """x: (B, Cin, T) float32 -> (B, Cout, T*up) float32."""
    B, Cin, T = x.shape
    up, cout, cin_p, cp = packed["up"], packed["cout"], packed["cin_p"], packed["cp"]
    assert Cin == packed["cin"]
    mm = packed["w_big"].dtype

    if t_tile is None:
        # Largest divisor of T whose output tile is <= 2048 lanes.  Re-derive per generation:
        # roughly halve for v7x (64 MiB VMEM) / v5e (16 MiB scoped default) at large channels.
        cands = [d for d in range(1, T + 1) if T % d == 0 and up * d <= 2048]
        t_tile = max(cands) if cands else T
    assert T % t_tile == 0, "t_tile must divide T"
    nT = T // t_tile
    Tw = t_tile + 6

    # Zero-pad channels to the packed width and time by the 3-sample halo, then materialize the
    # overlapping per-tile windows (input is the small tensor; ~1 extra HBM copy of it keeps the
    # BlockSpecs plain / non-overlapping).
    xp = jnp.pad(x.astype(jnp.float32), ((0, 0), (0, cin_p - Cin), (3, 3)))
    xw = jnp.stack([xp[:, :, g * t_tile:g * t_tile + Tw] for g in range(nT)], axis=1)

    kernel = functools.partial(_speech_upsample_kernel, t_tile=t_tile, up=up,
                               cin_p=cin_p, cp=cp)

    out = pl.pallas_call(
        kernel,
        out_shape=jax.ShapeDtypeStruct((B, nT, cp, up * t_tile), jnp.float32),
        grid=(B, nT),
        in_specs=[
            pl.BlockSpec((None, None, cin_p, Tw), lambda b, g: (b, g, 0, 0)),
            pl.BlockSpec(packed["w_big"].shape, lambda b, g: (0, 0)),
            pl.BlockSpec(packed["b_pm"].shape, lambda b, g: (0, 0)),
            pl.BlockSpec(packed["w_c"].shape, lambda b, g: (0, 0)),
            pl.BlockSpec(packed["b_out"].shape, lambda b, g: (0, 0)),
        ],
        out_specs=pl.BlockSpec((None, None, cp, up * t_tile), lambda b, g: (b, g, 0, 0)),
        scratch_shapes=[
            pltpu.VMEM((6 * cin_p, t_tile + 2), mm),
            pltpu.VMEM((2 * up * cp, t_tile + 2), mm),
            pltpu.VMEM((6 * cp, up * t_tile), mm),
        ],
        compiler_params=pltpu.CompilerParams(
            dimension_semantics=("parallel", "parallel"),
            vmem_limit_bytes=32 * 1024 * 1024),
    )(xw, packed["w_big"], packed["b_pm"], packed["w_c"], packed["b_out"])

    # De-block the phase-blocked output: tile g, column p*T_tile+q  ->  sample (g*T_tile+q)*up+p.
    # Pure layout plumbing; keep the phase-blocked tensor if the downstream consumer allows it.
    out = out[:, :, :cout, :]
    out = out.reshape(B, nT, cout, up, t_tile).transpose(0, 2, 1, 4, 3)
    return out.reshape(B, cout, T * up)


def init_params(key, cin, cout, groups, up):
    """Deterministic synthetic parameters with the shapes of the PyTorch module."""
    ks = jax.random.split(key, 10)
    s = 0.1
    return {
        "ct3_w": s * jax.random.normal(ks[0], (cin, cout // groups, 3 * up), jnp.float32),
        "ct3_b": s * jax.random.normal(ks[1], (cout,), jnp.float32),
        "c3_w":  s * jax.random.normal(ks[2], (cout, cout, 3), jnp.float32),
        "c3_b":  s * jax.random.normal(ks[3], (cout,), jnp.float32),
        "ct5_w": s * jax.random.normal(ks[4], (cin, cout // groups, 5 * up), jnp.float32),
        "ct5_b": s * jax.random.normal(ks[5], (cout,), jnp.float32),
        "c5_w":  s * jax.random.normal(ks[6], (cout, cout, 3), jnp.float32),
        "c5_b":  s * jax.random.normal(ks[7], (cout,), jnp.float32),
        "skip_w": s * jax.random.normal(ks[8], (cout, cin, 1), jnp.float32),
        "skip_b": s * jax.random.normal(ks[9], (cout,), jnp.float32),
    }


def ref_forward(x, p, up, groups):
    """Straightforward NumPy (float64) reference mirroring the PyTorch forward."""
    x = np.asarray(x, np.float64)
    slope = 0.1

    def leaky(v):
        return np.where(v > 0, v, slope * v)

    def conv1d_same(xx, w, b, pad):
        Cout, _, K = w.shape
        L = xx.shape[-1]
        xp_ = np.pad(xx, ((0, 0), (0, 0), (pad, pad)))
        out = np.zeros((xx.shape[0], Cout, L))
        for k in range(K):
            out += np.einsum("oc,bct->bot", w[:, :, k], xp_[:, :, k:k + L])
        return out + b[None, :, None]

    def conv_transpose(xx, w, b, stride, pad):
        Cin_, Coutg, K = w.shape
        Cout = Coutg * groups
        Bq, _, Tin = xx.shape
        Tout = (Tin - 1) * stride - 2 * pad + K
        out = np.zeros((Bq, Cout, Tout))
        ipg = Cin_ // groups
        for bi in range(Bq):
            for ci in range(Cin_):
                g = ci // ipg
                for ol in range(Coutg):
                    co = g * Coutg + ol
                    for ti in range(Tin):
                        for k in range(K):
                            to = ti * stride - pad + k
                            if 0 <= to < Tout:
                                out[bi, co, to] += w[ci, ol, k] * xx[bi, ci, ti]
        return out + b[None, :, None]

    a = leaky(x)
    x1 = np.repeat(conv1d_same(x, p["skip_w"], p["skip_b"], 0), up, axis=-1)
    x3 = conv1d_same(leaky(conv_transpose(a, p["ct3_w"], p["ct3_b"], up, up)),
                     p["c3_w"], p["c3_b"], 1)
    x5 = conv1d_same(leaky(conv_transpose(a, p["ct5_w"], p["ct5_b"], up, 2 * up)),
                     p["c5_w"], p["c5_b"], 1)
    return x1 + (x3 + x5) / np.sqrt(2.0)


if __name__ == "__main__":
    B, Cin, Cout, groups, T, UP = 2, 4, 4, 2, 16, 4

    key = jax.random.PRNGKey(0)
    kx, kp = jax.random.split(key)
    x = jax.random.normal(kx, (B, Cin, T), jnp.float32)
    params = init_params(kp, Cin, Cout, groups, UP)

    ref = ref_forward(np.asarray(x), {k: np.asarray(v) for k, v in params.items()},
                      UP, groups)

    # f32 matmul path: tight check of the phase / halo / seam bookkeeping.
    packed_f32 = pack_params(params, cin=Cin, cout=Cout, up=UP, groups=groups,
                             mm_dtype=jnp.float32)
    out_a = jax.block_until_ready(speech_upsample_block(x, packed_f32, t_tile=16))  # 1 tile
    np.testing.assert_allclose(np.asarray(out_a), ref, rtol=5e-3, atol=5e-3)
    out_b = jax.block_until_ready(speech_upsample_block(x, packed_f32, t_tile=8))   # 2 tiles
    np.testing.assert_allclose(np.asarray(out_b), ref, rtol=5e-3, atol=5e-3)

    # bf16 matmul operands (f32 accumulation) — the performance configuration.
    packed_bf16 = pack_params(params, cin=Cin, cout=Cout, up=UP, groups=groups,
                              mm_dtype=jnp.bfloat16)
    out_c = jax.block_until_ready(speech_upsample_block(x, packed_bf16, t_tile=8))
    np.testing.assert_allclose(np.asarray(out_c), ref, rtol=3e-2, atol=3e-2)

    print("KERNEL_OK")
</pallas_src>

<mosaic_0001>
module attributes {stable_mosaic.version = 11 : i64} {
  func.func @_speech_upsample_kernel(%arg0: i32, %arg1: i32, %arg2: memref<1x1x8x22xf32, #tpu.memory_space<vmem>>, %arg3: memref<72x48xf32, #tpu.memory_space<vmem>>, %arg4: memref<64x1xf32, #tpu.memory_space<vmem>>, %arg5: memref<8x48xf32, #tpu.memory_space<vmem>>, %arg6: memref<8x1xf32, #tpu.memory_space<vmem>>, %arg7: memref<1x1x8x64xf32, #tpu.memory_space<vmem>>, %arg8: memref<48x18xf32, #tpu.memory_space<vmem>>, %arg9: memref<64x18xf32, #tpu.memory_space<vmem>>, %arg10: memref<48x64xf32, #tpu.memory_space<vmem>>) attributes {dimension_semantics = [#tpu.dimension_semantics<parallel>, #tpu.dimension_semantics<parallel>], iteration_bounds = array<i64: 2, 1>, scalar_prefetch = 0 : i64, scratch_operands = 3 : i64, tpu.core_type = #tpu.core_type<tc>, window_params = [{transform_indices = @transform_0, window_bounds = array<i64: 1, 1, 8, 22>}, {pipeline_mode = #tpu.pipeline_mode<synchronous>, transform_indices = @transform_1, window_bounds = array<i64: 72, 48>}, {pipeline_mode = #tpu.pipeline_mode<synchronous>, transform_indices = @transform_2, window_bounds = array<i64: 64, 1>}, {pipeline_mode = #tpu.pipeline_mode<synchronous>, transform_indices = @transform_3, window_bounds = array<i64: 8, 48>}, {pipeline_mode = #tpu.pipeline_mode<synchronous>, transform_indices = @transform_4, window_bounds = array<i64: 8, 1>}, {transform_indices = @transform_5, window_bounds = array<i64: 1, 1, 8, 64>}]} {
    %c0 = arith.constant 0 : index
    %c0_0 = arith.constant 0 : index
    %c0_1 = arith.constant 0 : index
    %c0_2 = arith.constant 0 : index
    %0 = vector.load %arg2[%c0, %c0_0, %c0_1, %c0_2] : memref<1x1x8x22xf32, #tpu.memory_space<vmem>>, vector<1x1x8x22xf32>
    %1 = vector.shape_cast %0 : vector<1x1x8x22xf32> to vector<8x22xf32>
    %cst = arith.constant 0.000000e+00 : f32
    %2 = vector.broadcast %cst : f32 to vector<8x22xf32>
    %3 = arith.cmpf ogt, %1, %2 : vector<8x22xf32>
    %cst_3 = arith.constant 1.000000e-01 : f32
    %4 = vector.broadcast %cst_3 : f32 to vector<8x22xf32>
    %5 = arith.mulf %4, %1 : vector<8x22xf32>
    %6 = arith.select %3, %1, %5 : vector<8x22xi1>, vector<8x22xf32>
    %7 = vector.extract_strided_slice %6 {offsets = [0, 4], sizes = [8, 18], strides = [1, 1]} : vector<8x22xf32> to vector<8x18xf32>
    %c0_4 = arith.constant 0 : index
    %c0_5 = arith.constant 0 : index
    %8 = vector.load %arg8[%c0_4, %c0_5] : memref<48x18xf32, #tpu.memory_space<vmem>>, vector<8x18xf32>
    tpu.vector_store %arg8[%c0_4, %c0_5], %7 {strides = array<i32>} : memref<48x18xf32, #tpu.memory_space<vmem>>, vector<8x18xf32>,
    %9 = vector.extract_strided_slice %6 {offsets = [0, 3], sizes = [8, 18], strides = [1, 1]} : vector<8x22xf32> to vector<8x18xf32>
    %c8 = arith.constant 8 : index
    %c0_6 = arith.constant 0 : index
    %10 = vector.load %arg8[%c8, %c0_6] : memref<48x18xf32, #tpu.memory_space<vmem>>, vector<8x18xf32>
    tpu.vector_store %arg8[%c8, %c0_6], %9 {strides = array<i32>} : memref<48x18xf32, #tpu.memory_space<vmem>>, vector<8x18xf32>,
    %11 = vector.extract_strided_slice %6 {offsets = [0, 2], sizes = [8, 18], strides = [1, 1]} : vector<8x22xf32> to vector<8x18xf32>
    %c16 = arith.constant 16 : index
    %c0_7 = arith.constant 0 : index
    %12 = vector.load %arg8[%c16, %c0_7] : memref<48x18xf32, #tpu.memory_space<vmem>>, vector<8x18xf32>
    tpu.vector_store %arg8[%c16, %c0_7], %11 {strides = array<i32>} : memref<48x18xf32, #tpu.memory_space<vmem>>, vector<8x18xf32>,
    %13 = vector.extract_strided_slice %6 {offsets = [0, 1], sizes = [8, 18], strides = [1, 1]} : vector<8x22xf32> to vector<8x18xf32>
    %c24 = arith.constant 24 : index
    %c0_8 = arith.constant 0 : index
    %14 = vector.load %arg8[%c24, %c0_8] : memref<48x18xf32, #tpu.memory_space<vmem>>, vector<8x18xf32>
    tpu.vector_store %arg8[%c24, %c0_8], %13 {strides = array<i32>} : memref<48x18xf32, #tpu.memory_space<vmem>>, vector<8x18xf32>,
    %15 = vector.extract_strided_slice %6 {offsets = [0, 0], sizes = [8, 18], strides = [1, 1]} : vector<8x22xf32> to vector<8x18xf32>
    %c32 = arith.constant 32 : index
    %c0_9 = arith.constant 0 : index
    %16 = vector.load %arg8[%c32, %c0_9] : memref<48x18xf32, #tpu.memory_space<vmem>>, vector<8x18xf32>
    tpu.vector_store %arg8[%c32, %c0_9], %15 {strides = array<i32>} : memref<48x18xf32, #tpu.memory_space<vmem>>, vector<8x18xf32>,
    %17 = vector.extract_strided_slice %1 {offsets = [0, 2], sizes = [8, 18], strides = [1, 1]} : vector<8x22xf32> to vector<8x18xf32>
    %c40 = arith.constant 40 : index
    %c0_10 = arith.constant 0 : index
    %18 = vector.load %arg8[%c40, %c0_10] : memref<48x18xf32, #tpu.memory_space<vmem>>, vector<8x18xf32>
    tpu.vector_store %arg8[%c40, %c0_10], %17 {strides = array<i32>} : memref<48x18xf32, #tpu.memory_space<vmem>>, vector<8x18xf32>,
    %c0_11 = arith.constant 0 : index
    %c0_12 = arith.constant 0 : index
    %19 = vector.load %arg3[%c0_11, %c0_12] : memref<72x48xf32, #tpu.memory_space<vmem>>, vector<72x48xf32>
    %c0_13 = arith.constant 0 : index
    %c0_14 = arith.constant 0 : index
    %20 = vector.load %arg8[%c0_13, %c0_14] : memref<48x18xf32, #tpu.memory_space<vmem>>, vector<48x18xf32>
    %cst_15 = arith.constant dense<0.000000e+00> : vector<72x18xf32>
    %21 = tpu.matmul %19, %20, %cst_15 {dimension_numbers = #tpu.dot_dimension_numbers<[1], [0], [0], [1], [0, 0, 1, 1], [], []>} : vector<72x48xf32>, vector<48x18xf32>, vector<72x18xf32> -> vector<72x18xf32>
    %22 = vector.extract_strided_slice %21 {offsets = [0, 0], sizes = [64, 18], strides = [1, 1]} : vector<72x18xf32> to vector<64x18xf32>
    %c0_16 = arith.constant 0 : index
    %c0_17 = arith.constant 0 : index
    %23 = vector.load %arg4[%c0_16, %c0_17] : memref<64x1xf32, #tpu.memory_space<vmem>>, vector<64x1xf32>
    %24 = vector.broadcast %23 : vector<64x1xf32> to vector<64x18xf32>
    %25 = arith.addf %22, %24 : vector<64x18xf32>
    %cst_18 = arith.constant 0.000000e+00 : f32
    %26 = vector.broadcast %cst_18 : f32 to vector<64x18xf32>
    %27 = arith.cmpf ogt, %25, %26 : vector<64x18xf32>
    %cst_19 = arith.constant 1.000000e-01 : f32
    %28 = vector.broadcast %cst_19 : f32 to vector<64x18xf32>
    %29 = arith.mulf %28, %25 : vector<64x18xf32>
    %30 = arith.select %27, %25, %29 : vector<64x18xi1>, vector<64x18xf32>
    %c0_20 = arith.constant 0 : index
    %c0_21 = arith.constant 0 : index
    %31 = vector.load %arg9[%c0_20, %c0_21] : memref<64x18xf32, #tpu.memory_space<vmem>>, vector<64x18xf32>
    tpu.vector_store %arg9[%c0_20, %c0_21], %30 {strides = array<i32>} : memref<64x18xf32, #tpu.memory_space<vmem>>, vector<64x18xf32>,
    %32 = vector.extract_strided_slice %21 {offsets = [64, 1], sizes = [8, 16], strides = [1, 1]} : vector<72x18xf32> to vector<8x16xf32>
    %c0_22 = arith.constant 0 : index
    %c1 = arith.constant 1 : index
    %33 = vector.load %arg9[%c0_22, %c1] : memref<64x18xf32, #tpu.memory_space<vmem>>, vector<16x16xf32>
    %c16_23 = arith.constant 16 : index
    %c1_24 = arith.constant 1 : index
    %34 = vector.load %arg9[%c16_23, %c1_24] : memref<64x18xf32, #tpu.memory_space<vmem>>, vector<16x16xf32>
    %c32_25 = arith.constant 32 : index
    %c1_26 = arith.constant 1 : index
    %35 = vector.load %arg9[%c32_25, %c1_26] : memref<64x18xf32, #tpu.memory_space<vmem>>, vector<16x16xf32>
    %c48 = arith.constant 48 : index
    %c1_27 = arith.constant 1 : index
    %36 = vector.load %arg9[%c48, %c1_27] : memref<64x18xf32, #tpu.memory_space<vmem>>, vector<16x16xf32>
    %37 = tpu.concatenate %33, %34, %35, %36 in 1 : vector<16x16xf32>, vector<16x16xf32>, vector<16x16xf32>, vector<16x16xf32> -> vector<16x64xf32>
    %c16_28 = arith.constant 16 : index
    %c0_29 = arith.constant 0 : index
    %38 = vector.load %arg10[%c16_28, %c0_29] : memref<48x64xf32, #tpu.memory_space<vmem>>, vector<16x64xf32>
    tpu.vector_store %arg10[%c16_28, %c0_29], %37 {strides = array<i32>} : memref<48x64xf32, #tpu.memory_space<vmem>>, vector<16x64xf32>,
    %c48_30 = arith.constant 48 : index
    %c0_31 = arith.constant 0 : index
    %39 = vector.load %arg9[%c48_30, %c0_31] : memref<64x18xf32, #tpu.memory_space<vmem>>, vector<16x16xf32>
    %40 = tpu.concatenate %39, %33, %34, %35 in 1 : vector<16x16xf32>, vector<16x16xf32>, vector<16x16xf32>, vector<16x16xf32> -> vector<16x64xf32>
    %c0_32 = arith.constant 0 : index
    %c0_33 = arith.constant 0 : index
    %41 = vector.load %arg10[%c0_32, %c0_33] : memref<48x64xf32, #tpu.memory_space<vmem>>, vector<16x64xf32>
    tpu.vector_store %arg10[%c0_32, %c0_33], %40 {strides = array<i32>} : memref<48x64xf32, #tpu.memory_space<vmem>>, vector<16x64xf32>,
    %c0_34 = arith.constant 0 : index
    %c2 = arith.constant 2 : index
    %42 = vector.load %arg9[%c0_34, %c2] : memref<64x18xf32, #tpu.memory_space<vmem>>, vector<16x16xf32>
    %43 = tpu.concatenate %34, %35, %36, %42 in 1 : vector<16x16xf32>, vector<16x16xf32>, vector<16x16xf32>, vector<16x16xf32> -> vector<16x64xf32>
    %c32_35 = arith.constant 32 : index
    %c0_36 = arith.constant 0 : index
    %44 = vector.load %arg10[%c32_35, %c0_36] : memref<48x64xf32, #tpu.memory_space<vmem>>, vector<16x64xf32>
    tpu.vector_store %arg10[%c32_35, %c0_36], %43 {strides = array<i32>} : memref<48x64xf32, #tpu.memory_space<vmem>>, vector<16x64xf32>,
    %c0_i32 = arith.constant 0 : i32
    %45 = arith.cmpi eq, %arg1, %c0_i32 : i32
    %46 = arith.extui %45 : i1 to i32
    %c0_i32_37 = arith.constant 0 : i32
    %47 = arith.cmpi ne, %46, %c0_i32_37 : i32
    scf.if %47 {
      %cst_51 = arith.constant 0.000000e+00 : f32
      %62 = vector.broadcast %cst_51 : f32 to vector<16x1xf32>
      %c0_52 = arith.constant 0 : index
      %c0_53 = arith.constant 0 : index
      %63 = vector.load %arg10[%c0_52, %c0_53] : memref<48x64xf32, #tpu.memory_space<vmem>>, vector<16x1xf32>
      tpu.vector_store %arg10[%c0_52, %c0_53], %62 {strides = array<i32>} : memref<48x64xf32, #tpu.memory_space<vmem>>, vector<16x1xf32>,
    } else {
    }
    %c0_i32_38 = arith.constant 0 : i32
    %48 = arith.cmpi eq, %arg1, %c0_i32_38 : i32
    %49 = arith.extui %48 : i1 to i32
    %c0_i32_39 = arith.constant 0 : i32
    %50 = arith.cmpi ne, %49, %c0_i32_39 : i32
    scf.if %50 {
      %cst_51 = arith.constant 0.000000e+00 : f32
      %62 = vector.broadcast %cst_51 : f32 to vector<16x1xf32>
      %c32_52 = arith.constant 32 : index
      %c63 = arith.constant 63 : index
      %63 = vector.load %arg10[%c32_52, %c63] : memref<48x64xf32, #tpu.memory_space<vmem>>, vector<16x1xf32>
      tpu.vector_store %arg10[%c32_52, %c63], %62 {strides = array<i32>} : memref<48x64xf32, #tpu.memory_space<vmem>>, vector<16x1xf32>,
    } else {
    }
    %c0_40 = arith.constant 0 : index
    %c0_41 = arith.constant 0 : index
    %51 = vector.load %arg5[%c0_40, %c0_41] : memref<8x48xf32, #tpu.memory_space<vmem>>, vector<8x48xf32>
    %c0_42 = arith.constant 0 : index
    %c0_43 = arith.constant 0 : index
    %52 = vector.load %arg10[%c0_42, %c0_43] : memref<48x64xf32, #tpu.memory_space<vmem>>, vector<48x64xf32>
    %cst_44 = arith.constant dense<0.000000e+00> : vector<8x64xf32>
    %53 = tpu.matmul %51, %52, %cst_44 {dimension_numbers = #tpu.dot_dimension_numbers<[1], [0], [0], [1], [0, 0, 1, 1], [], []>} : vector<8x48xf32>, vector<48x64xf32>, vector<8x64xf32> -> vector<8x64xf32>
    %54 = tpu.concatenate %32, %32, %32, %32 in 1 : vector<8x16xf32>, vector<8x16xf32>, vector<8x16xf32>, vector<8x16xf32> -> vector<8x64xf32>
    %55 = arith.addf %53, %54 : vector<8x64xf32>
    %c0_45 = arith.constant 0 : index
    %c0_46 = arith.constant 0 : index
    %56 = vector.load %arg6[%c0_45, %c0_46] : memref<8x1xf32, #tpu.memory_space<vmem>>, vector<8x1xf32>
    %57 = vector.broadcast %56 : vector<8x1xf32> to vector<8x64xf32>
    %58 = arith.addf %55, %57 : vector<8x64xf32>
    %c0_47 = arith.constant 0 : index
    %c0_48 = arith.constant 0 : index
    %c0_49 = arith.constant 0 : index
    %c0_50 = arith.constant 0 : index
    %59 = vector.load %arg7[%c0_47, %c0_48, %c0_49, %c0_50] : memref<1x1x8x64xf32, #tpu.memory_space<vmem>>, vector<1x1x8x64xf32>
    %60 = vector.shape_cast %59 : vector<1x1x8x64xf32> to vector<8x64xf32>
    %61 = vector.shape_cast %58 : vector<8x64xf32> to vector<1x1x8x64xf32>
    tpu.vector_store %arg7[%c0_47, %c0_48, %c0_49, %c0_50], %61 {strides = array<i32>} : memref<1x1x8x64xf32, #tpu.memory_space<vmem>>, vector<1x1x8x64xf32>,
    return
  }
  func.func @transform_0(%arg0: i32, %arg1: i32) -> (i32, i32, i32, i32) {
    %c0_i32 = arith.constant 0 : i32
    %c0_i32_0 = arith.constant 0 : i32
    %c0_i32_1 = arith.constant 0 : i32
    return %arg0, %arg1, %c0_i32, %c0_i32_0 : i32, i32, i32, i32
  }
  func.func @transform_1(%arg0: i32, %arg1: i32) -> (i32, i32) {
    %c0_i32 = arith.constant 0 : i32
    %c0_i32_0 = arith.constant 0 : i32
    %c0_i32_1 = arith.constant 0 : i32
    return %c0_i32, %c0_i32_0 : i32, i32
  }
  func.func @transform_2(%arg0: i32, %arg1: i32) -> (i32, i32) {
    %c0_i32 = arith.constant 0 : i32
    %c0_i32_0 = arith.constant 0 : i32
    %c0_i32_1 = arith.constant 0 : i32
    return %c0_i32, %c0_i32_0 : i32, i32
  }
  func.func @transform_3(%arg0: i32, %arg1: i32) -> (i32, i32) {
    %c0_i32 = arith.constant 0 : i32
    %c0_i32_0 = arith.constant 0 : i32
    %c0_i32_1 = arith.constant 0 : i32
    return %c0_i32, %c0_i32_0 : i32, i32
  }
  func.func @transform_4(%arg0: i32, %arg1: i32) -> (i32, i32) {
    %c0_i32 = arith.constant 0 : i32
    %c0_i32_0 = arith.constant 0 : i32
    %c0_i32_1 = arith.constant 0 : i32
    return %c0_i32, %c0_i32_0 : i32, i32
  }
  func.func @transform_5(%arg0: i32, %arg1: i32) -> (i32, i32, i32, i32) {
    %c0_i32 = arith.constant 0 : i32
    %c0_i32_0 = arith.constant 0 : i32
    %c0_i32_1 = arith.constant 0 : i32
    return %arg0, %arg1, %c0_i32, %c0_i32_0 : i32, i32, i32, i32
  }
}

</mosaic_0001>

<llo_original>
// kernel: tpu_custom_call.1
$region0: #{tpu_custom_call.1}
  #allocation0 [shape = 'u32[]', space=smem, size = 0x4, offset = 0x4, fixed_abs, tag = 'smem constant byte address 0x4 - core index']
  #allocation1 [shape = 'u32[144,128]{1,0:T(1,128)}', space=vmem, size = 0x12000, scoped, tag = 'internal scratch']
  #allocation2 [shape = 'f32[48,18]{1,0:T(8,128)}', space=vmem, size = 0x6000, scoped, tag = 'scratch operand']
  #allocation3 [shape = 'f32[64,18]{1,0:T(8,128)}', space=vmem, size = 0x8000, scoped, tag = 'scratch operand']
  #allocation4 [shape = 'f32[48,64]{1,0:T(8,128)}', space=vmem, size = 0x6000, scoped, tag = 'scratch operand']
  %s0 = inlined_call_operand.vmem [shape: f32[2,1,8,22], index: 0, kind: input, shape index: {}]
  %s1 = inlined_call_operand.vmem [shape: f32[72,48], index: 1, kind: input, shape index: {}]
  %s2 = inlined_call_operand.vmem [shape: f32[64,1], index: 2, kind: input, shape index: {}]
  %s3 = inlined_call_operand.vmem [shape: f32[8,48], index: 3, kind: input, shape index: {}]
  %s4 = inlined_call_operand.vmem [shape: f32[8,1], index: 4, kind: input, shape index: {}]
  %s5 = inlined_call_operand.hbm [shape: f32[2,1,8,64], index: 5, kind: output, shape index: {}]
  %s6 = sld [smem:[#allocation0]]
  $region57: #{tpu_custom_call.1} parent=0
    _
  %s8 = ssub.s32 1, %s6
  %s9 = scalar_select 0, %s8, %s6
  $region1: #{tpu_custom_call.1} parent=0
    #allocation5 [shape = 'u8[8192]{0}', space=vmem, size = 0x2000, scoped, tag = 'output window, operand 0']
    #allocation6 [shape = 's32[2]{0}', space=sflag, size = 0x8, scoped, tag = 'scoped memory for tpu_custom_call.1']
    %10 = vsyncpa [#allocation6], 0
    %s11 = scalar_lea.sflag [#allocation6], 1
    %12 = vsyncpa %s11, 0
    loop: start=0, step=1, limit=4
    $region2: #{tpu_custom_call.1} parent=1 // loop_pre_header
      _
    $region3: #{tpu_custom_call.1} parent=1 // loop_header
      %s14 = sphi 0, %s18
      %p15 = scmp.ge.s32.totalorder %s14, 4
      %s21 = sphi 0, %s33
      %s22 = sphi 0, %s29
      %s23 = sphi 0, %s21
      %s24 = sphi 0, %s22
      %s25 = sphi 0, %s23
      %s26 = sphi 0, %s24
      %s38 = sphi 0, %s40
      %s41 = sphi 0, %s38
      %s42 = sphi 0, %s41
      %s58 = sphi 0, %s42
      %s62 = sphi 0, %s62
      %s64 = sphi 0, %s62
      %s65 = sphi 0, %s64
      %s79 = sphi 0, %s65
      %s83 = sphi 0, %s83
      %s85 = sphi 0, %s83
      %s86 = sphi 0, %s85
      %s100 = sphi 0, %s86
      %s104 = sphi 0, %s104
      %s106 = sphi 0, %s104
      %s107 = sphi 0, %s106
      %s121 = sphi 0, %s107
      %s125 = sphi 0, %s125
      %s127 = sphi 0, %s125
      %s128 = sphi 0, %s127
      %s142 = sphi 0, %s128
      %s150 = sphi 0, %s152
      %s153 = sphi 0, %s150
      %s154 = sphi 0, %s153
      %s170 = sphi 0, %s154
    $region4: #{tpu_custom_call.1} parent=1 // loop_header_branch
      %17 = sbr.rel (%p15) target = $region8
    $region5: #{tpu_custom_call.1} parent=1 // loop_body
      %s19 = ssub.s32 %s14, 1
      %s20 = ssub.s32 %s14, 2
      %s27 = sadd.s32 1, %s22
      %p28 = scmp.ge.s32.totalorder %s27, 1
      %s29 = scalar_select %p28, 0, %s27
      %s30 = sadd.s32 1, %s21
      %s31 = scalar_select %p28, %s30, %s21
      %p32 = scmp.ge.s32.totalorder %s31, 2
      %s33 = scalar_select %p32, 0, %s31
      %s34 = ssub.s32 %s21, %s33
      %s35 = ssub.s32 %s22, %s29
      %s36 = sor.u32 %s34, %s35
      %p37 = scmp.eq.s32.totalorder %s36, 0
      %s39 = sadd.s32 %s38, 1
      %s40 = scalar_select %p37, %s38, %s39
      %p43 = pneg %p37
      %p44 = scmp.eq.s32.totalorder %s14, 1
      %p45 = por %p43, %p44
      %p46 = scmp.ne.s32.totalorder %s38, %s41
      %p47 = scmp.eq.s32.totalorder %s14, 0
      %p48 = por %p46, %p47
      %p49 = scmp.ne.s32.totalorder %s38, %s41
      %p50 = scmp.eq.s32.totalorder %s19, 1
      %p51 = por %p49, %p50
      %p52 = scmp.ne.s32.totalorder %s41, %s42
      %p53 = scmp.eq.s32.totalorder %s19, 0
      %p54 = por %p52, %p53
      %p55 = scmp.ne.s32.totalorder %s41, %s42
      %p56 = scmp.eq.s32.totalorder %s20, 1
      %p57 = por %p55, %p56
      %p59 = scmp.ne.s32.totalorder %s42, %s58
      %p60 = scmp.eq.s32.totalorder %s20, 0
      %p61 = por %p59, %p60
      %s63 = sadd.s32 %s62, 1
      %p66 = scmp.eq.s32.totalorder %s14, 1
      %p67 = scmp.ne.s32.totalorder %s62, %s64
      %p68 = scmp.eq.s32.totalorder %s14, 0
      %p69 = por %p67, %p68
      %p70 = scmp.ne.s32.totalorder %s62, %s64
      %p71 = scmp.eq.s32.totalorder %s19, 1
      %p72 = por %p70, %p71
      %p73 = scmp.ne.s32.totalorder %s64, %s65
      %p74 = scmp.eq.s32.totalorder %s19, 0
      %p75 = por %p73, %p74
      %p76 = scmp.ne.s32.totalorder %s64, %s65
      %p77 = scmp.eq.s32.totalorder %s20, 1
      %p78 = por %p76, %p77
      %p80 = scmp.ne.s32.totalorder %s65, %s79
      %p81 = scmp.eq.s32.totalorder %s20, 0
      %p82 = por %p80, %p81
      %s84 = sadd.s32 %s83, 1
      %p87 = scmp.eq.s32.totalorder %s14, 1
      %p88 = scmp.ne.s32.totalorder %s83, %s85
      %p89 = scmp.eq.s32.totalorder %s14, 0
      %p90 = por %p88, %p89
      %p91 = scmp.ne.s32.totalorder %s83, %s85
      %p92 = scmp.eq.s32.totalorder %s19, 1
      %p93 = por %p91, %p92
      %p94 = scmp.ne.s32.totalorder %s85, %s86
      %p95 = scmp.eq.s32.totalorder %s19, 0
      %p96 = por %p94, %p95
      %p97 = scmp.ne.s32.totalorder %s85, %s86
      %p98 = scmp.eq.s32.totalorder %s20, 1
      %p99 = por %p97, %p98
      %p101 = scmp.ne.s32.totalorder %s86, %s100
      %p102 = scmp.eq.s32.totalorder %s20, 0
      %p103 = por %p101, %p102
      %s105 = sadd.s32 %s104, 1
      %p108 = scmp.eq.s32.totalorder %s14, 1
      %p109 = scmp.ne.s32.totalorder %s104, %s106
      %p110 = scmp.eq.s32.totalorder %s14, 0
      %p111 = por %p109, %p110
      %p112 = scmp.ne.s32.totalorder %s104, %s106
      %p113 = scmp.eq.s32.totalorder %s19, 1
      %p114 = por %p112, %p113
      %p115 = scmp.ne.s32.totalorder %s106, %s107
      %p116 = scmp.eq.s32.totalorder %s19, 0
      %p117 = por %p115, %p116
      %p118 = scmp.ne.s32.totalorder %s106, %s107
      %p119 = scmp.eq.s32.totalorder %s20, 1
      %p120 = por %p118, %p119
      %p122 = scmp.ne.s32.totalorder %s107, %s121
      %p123 = scmp.eq.s32.totalorder %s20, 0
      %p124 = por %p122, %p123
      %s126 = sadd.s32 %s125, 1
      %p129 = scmp.eq.s32.totalorder %s14, 1
      %p130 = scmp.ne.s32.totalorder %s125, %s127
      %p131 = scmp.eq.s32.totalorder %s14, 0
      %p132 = por %p130, %p131
      %p133 = scmp.ne.s32.totalorder %s125, %s127
      %p134 = scmp.eq.s32.totalorder %s19, 1
      %p135 = por %p133, %p134
      %p136 = scmp.ne.s32.totalorder %s127, %s128
      %p137 = scmp.eq.s32.totalorder %s19, 0
      %p138 = por %p136, %p137
      %p139 = scmp.ne.s32.totalorder %s127, %s128
      %p140 = scmp.eq.s32.totalorder %s20, 1
      %p141 = por %p139, %p140
      %p143 = scmp.ne.s32.totalorder %s128, %s142
      %p144 = scmp.eq.s32.totalorder %s20, 0
      %p145 = por %p143, %p144
      %s146 = ssub.s32 %s21, %s33
      %s147 = ssub.s32 %s22, %s29
      %s148 = sor.u32 %s146, %s147
      %p149 = scmp.eq.s32.totalorder %s148, 0
      %s151 = sadd.s32 %s150, 1
      %s152 = scalar_select %p149, %s150, %s151
      %p155 = pneg %p149
      %p156 = scmp.eq.s32.totalorder %s14, 1
      %p157 = por %p155, %p156
      %p158 = scmp.ne.s32.totalorder %s150, %s153
      %p159 = scmp.eq.s32.totalorder %s14, 0
      %p160 = por %p158, %p159
      %p161 = scmp.ne.s32.totalorder %s150, %s153
      %p162 = scmp.eq.s32.totalorder %s19, 1
      %p163 = por %p161, %p162
      %p164 = scmp.ne.s32.totalorder %s153, %s154
      %p165 = scmp.eq.s32.totalorder %s19, 0
      %p166 = por %p164, %p165
      %p167 = scmp.ne.s32.totalorder %s153, %s154
      %p168 = scmp.eq.s32.totalorder %s20, 1
      %p169 = por %p167, %p168
      %p171 = scmp.ne.s32.totalorder %s154, %s170
      %p172 = scmp.eq.s32.totalorder %s20, 0
      %p173 = por %p171, %p172
      %p174 = scmp.le.s32.totalorder 1, %s14
      %p175 = scmp.lt.s32.totalorder %s14, 3
      %p176 = pnand %p174, %p175
      %p177 = pneg %p176
      // Predicated region
      $region9: #{tpu_custom_call.1} parent=5 // pred_check
        _
      $region10: #{tpu_custom_call.1} parent=5 // pred_check_branch
        %179 = sbr.rel (%p176) target = $region12
      $region11: #{tpu_custom_call.1} parent=5 // pred_region
        %s180 = ssub.s32 %s14, 1
        // Predicated region
        $region13: #{tpu_custom_call.1} parent=11 // pred_check
          %p181 = pneg %p75
        $region14: #{tpu_custom_call.1} parent=11 // pred_check_branch
          %183 = sbr.rel (%p181) target = $region16
        $region15: #{tpu_custom_call.1} parent=11 // pred_region
          _
        $region16: #{tpu_custom_call.1} parent=11 // pred_fallthru
          _
        // Predicated region
        $region17: #{tpu_custom_call.1} parent=11 // pred_check
          %p184 = pneg %p96
        $region18: #{tpu_custom_call.1} parent=11 // pred_check_branch
          %186 = sbr.rel (%p184) target = $region20
        $region19: #{tpu_custom_call.1} parent=11 // pred_region
          _
        $region20: #{tpu_custom_call.1} parent=11 // pred_fallthru
          _
        // Predicated region
        $region21: #{tpu_custom_call.1} parent=11 // pred_check
          %p187 = pneg %p117
        $region22: #{tpu_custom_call.1} parent=11 // pred_check_branch
          %189 = sbr.rel (%p187) target = $region24
        $region23: #{tpu_custom_call.1} parent=11 // pred_region
          _
        $region24: #{tpu_custom_call.1} parent=11 // pred_fallthru
          _
        // Predicated region
        $region25: #{tpu_custom_call.1} parent=11 // pred_check
          %p190 = pneg %p138
        $region26: #{tpu_custom_call.1} parent=11 // pred_check_branch
          %192 = sbr.rel (%p190) target = $region28
        $region27: #{tpu_custom_call.1} parent=11 // pred_region
          _
        $region28: #{tpu_custom_call.1} parent=11 // pred_fallthru
          _
      $region12: #{tpu_custom_call.1} parent=5 // pred_fallthru
        _
      %p193 = scmp.lt.s32.totalorder %s14, 2
      // Predicated region
      $region29: #{tpu_custom_call.1} parent=5 // pred_check
        %p194 = pneg %p193
      $region30: #{tpu_custom_call.1} parent=5 // pred_check_branch
        %196 = sbr.rel (%p194) target = $region32
      $region31: #{tpu_custom_call.1} parent=5 // pred_region
        // Predicated region
        $region33: #{tpu_custom_call.1} parent=31 // pred_check
          %p197 = pneg %p48
        $region34: #{tpu_custom_call.1} parent=31 // pred_check_branch
          %199 = sbr.rel (%p197) target = $region36
        $region35: #{tpu_custom_call.1} parent=31 // pred_region
          %p200 = scmp.lt.s32.totalorder %s21, 1
          %s201 = scalar_select %p200, %s21, 1
          %p202 = scmp.lt.s32.totalorder %s22, 0
          %s203 = scalar_select %p202, %s22, 0
          %s204 = sadd.s32 %s203, %s201
          %s205 = smul.addr %s204, 8
          %s206 = scalar_lea.vmem %s0, %s205
        $region36: #{tpu_custom_call.1} parent=31 // pred_fallthru
          _
      $region32: #{tpu_custom_call.1} parent=5 // pred_fallthru
        _
      %p207 = scmp.le.s32.totalorder 1, %s14
      %p208 = scmp.lt.s32.totalorder %s14, 3
      %p209 = pnand %p207, %p208
      %p210 = pneg %p209
      // Predicated region
      $region37: #{tpu_custom_call.1} parent=5 // pred_check
        _
      $region38: #{tpu_custom_call.1} parent=5 // pred_check_branch
        %212 = sbr.rel (%p209) target = $region40
      $region39: #{tpu_custom_call.1} parent=5 // pred_region
        %s213 = ssub.s32 %s14, 1
        %p214 = scmp.lt.s32.totalorder %s23, 1
        %s215 = scalar_select %p214, %s23, 1
        %p216 = scmp.lt.s32.totalorder %s24, 0
        %s217 = scalar_select %p216, %s24, 0
        %s218 = sadd.s32 %s217, %s215
        %s219 = smul.addr %s218, 8
        %s220 = scalar_lea.vmem %s0, %s219
        %p221 = pneg %p54
        %p222 = pneg %p51
        %p223 = pneg %p75
        %p224 = pneg %p72
        %p225 = pneg %p96
        %p226 = pneg %p93
        %p227 = pneg %p117
        %p228 = pneg %p114
        %p229 = pneg %p138
        %p230 = pneg %p135
        %p231 = pneg %p166
        %p232 = pneg %p163
        %s233 = sand.u32 %s153, 1
        %s234 = scalar_lea.sflag [#allocation6], %s233
        %s235 = sand.u32 %s153, 1
        %s236 = smul.addr %s235, 8
        %s237 = scalar_lea.vmem [#allocation5], %s236
        %p238 = scmp.lt.s32.totalorder %s23, 1
        %s239 = scalar_select %p238, %s23, 1
        %p240 = scmp.lt.s32.totalorder %s24, 0
        %s241 = scalar_select %p240, %s24, 0
        %s242 = sadd.s32 %s241, %s239
        %s243 = smul.addr %s242, 8
        %s244 = scalar_lea.vmem %s0, %s243
        %v245 = vld [vmem:[%s244] sm:$0xff]
        %vm246 = vcmp.gt.f32.partialorder %v245, 0.0
        %v247 = vmul.f32 %v245, 0.1
        %v248 = vsel %vm246, %v245, %v247
        %250 = vrot.lane.b32.xlu0 %v248, 124
        %v251 = vpop.permute.xlu0 %250
        %vm253 = vcmask 146432
        %254 = vst.msk [vmem:[#allocation2] sm:$0xff] %vm253, %v251
        %255 = vrot.lane.b32.xlu0 %v248, 125
        %v256 = vpop.permute.xlu0 %255
        %258 = vst.msk [vmem:[#allocation2 + $0x8] sm:$0xff] %vm253, %v256
        %259 = vrot.lane.b32.xlu0 %v248, 126
        %v260 = vpop.permute.xlu0 %259
        %262 = vst.msk [vmem:[#allocation2 + $0x10] sm:$0xff] %vm253, %v260
        %263 = vrot.lane.b32.xlu0 %v248, 127
        %v264 = vpop.permute.xlu0 %263
        %266 = vst.msk [vmem:[#allocation2 + $0x18] sm:$0xff] %vm253, %v264
        %267 = vst.msk [vmem:[#allocation2 + $0x20] sm:$0xff] %vm253, %v248
        %269 = vrot.lane.b32.xlu0 %v245, 126
        %v270 = vpop.permute.xlu0 %269
        %272 = vst.msk [vmem:[#allocation2 + $0x28] sm:$0xff] %vm253, %v270
        %v273 = vld [vmem:[%s1] sm:$0xff]
        %v274 = vld [vmem:[%s1 + $0x8] sm:$0xff]
        %v275 = vld [vmem:[%s1 + $0x10] sm:$0xff]
        %v276 = vld [vmem:[%s1 + $0x18] sm:$0xff]
        %v277 = vld [vmem:[%s1 + $0x20] sm:$0xff]
        %v278 = vld [vmem:[%s1 + $0x28] sm:$0xff]
        %v279 = vld [vmem:[%s1 + $0x30] sm:$0xff]
        %v280 = vld [vmem:[%s1 + $0x38] sm:$0xff]
        %v281 = vld [vmem:[%s1 + $0x40] sm:$0xff]
        %v282 = vld [vmem:[#allocation2] sm:$0xff]
        %v283 = vld [vmem:[#allocation2 + $0x8] sm:$0xff]
        %v284 = vld [vmem:[#allocation2 + $0x10] sm:$0xff]
        %v285 = vld [vmem:[#allocation2 + $0x18] sm:$0xff]
        %v286 = vld [vmem:[#allocation2 + $0x20] sm:$0xff]
        %v287 = vld [vmem:[#allocation2 + $0x28] sm:$0xff]
        %vm288 = vcmask 392192
        %v290 = vsel %vm288, %v273, 0
        %v293 = vsel %vm288, %v274, 0
        %v296 = vsel %vm288, %v275, 0
        %v299 = vsel %vm288, %v276, 0
        %v302 = vsel %vm288, %v277, 0
        %v305 = vsel %vm288, %v278, 0
        %v308 = vsel %vm288, %v279, 0
        %v311 = vsel %vm288, %v280, 0
        %v314 = vsel %vm288, %v281, 0
        %316 = vmatprep.subr.mxu0 0.0
        %317 = vmatpush1.msra.mxu0 %v282
        %318 = vmatprep.subr.mxu0 0.0
        %319 = vmatpush1.msra.mxu0 %v283
        %320 = vmatprep.subr.mxu0 0.0
        %321 = vmatpush1.msra.mxu0 %v284
        %322 = vmatprep.subr.mxu0 0.0
        %323 = vmatpush1.msra.mxu0 %v285
        %324 = vmatprep.subr.mxu0 0.0
        %325 = vmatpush1.msra.mxu0 %v286
        %326 = vmatprep.subr.mxu0 0.0
        %327 = vmatpush1.msra.mxu0 %v287
        %328 = vmatprep.subr.mxu0 0.0
        %329 = vmatpush1.msra.mxu0 0.0
        %330 = vmatprep.subr.mxu0 0.0
        %331 = vmatpush1.msra.mxu0 0.0
        %332 = vmatprep.subr.mxu0 0.0
        %333 = vmatpush1.msra.mxu0 0.0
        %334 = vmatprep.subr.mxu0 0.0
        %335 = vmatpush1.msra.mxu0 0.0
        %336 = vmatprep.subr.mxu0 0.0
        %337 = vmatpush1.msra.mxu0 0.0
        %338 = vmatprep.subr.mxu0 0.0
        %339 = vmatpush1.msra.mxu0 0.0
        %340 = vmatprep.subr.mxu0 0.0
        %341 = vmatpush1.msra.mxu0 0.0
        %342 = vmatprep.subr.mxu0 0.0
        %343 = vmatpush1.msra.mxu0 0.0
        %344 = vmatprep.subr.mxu0 0.0
        %345 = vmatpush1.msra.mxu0 0.0
        %346 = vmatprep.subr.mxu0 0.0
        %347 = vmatpush1.msra.mxu0 0.0
        %348 = vmatprep.subr.mxu0 0.0
        %349 = vmatpush1.msra.mxu0 0.0
        %350 = vmatprep.subr.mxu0 0.0
        %351 = vmatpush1.msra.mxu0 0.0
        %352 = vmatprep.subr.mxu0 0.0
        %353 = vmatpush1.msra.mxu0 0.0
        %354 = vmatprep.subr.mxu0 0.0
        %355 = vmatpush1.msra.mxu0 0.0
        %356 = vmatprep.subr.mxu0 0.0
        %357 = vmatpush1.msra.mxu0 0.0
        %358 = vmatprep.subr.mxu0 0.0
        %359 = vmatpush1.msra.mxu0 0.0
        %360 = vmatprep.subr.mxu0 0.0
        %361 = vmatpush1.msra.mxu0 0.0
        %362 = vmatprep.subr.mxu0 0.0
        %363 = vmatpush1.msra.mxu0 0.0
        %364 = vmatprep.subr.mxu0 0.0
        %365 = vmatpush1.msra.mxu0 0.0
        %366 = vmatprep.subr.mxu0 0.0
        %367 = vmatpush1.msra.mxu0 0.0
        %368 = vmatprep.subr.mxu0 0.0
        %369 = vmatpush1.msra.mxu0 0.0
        %370 = vmatprep.subr.mxu0 0.0
        %371 = vmatpush1.msra.mxu0 0.0
        %372 = vmatprep.subr.mxu0 0.0
        %373 = vmatpush1.msra.mxu0 0.0
        %374 = vmatprep.subr.mxu0 0.0
        %375 = vmatpush1.msra.mxu0 0.0
        %376 = vmatprep.subr.mxu0 0.0
        %377 = vmatpush1.msra.mxu0 0.0
        %378 = vmatprep.subr.mxu0 0.0
        %379 = vmatpush1.msra.mxu0 0.0
        %380 = vmatprep.mubr.f32.mxu0 0.0
        %381 = vmatmul.mubr.f32.gmra.mrb[0].mxu0 %v290
        %v382 = vpop.f32.mrb[0].mxu0
        %v383 = vadd.f32 0.0, %v382
        %v384 = vpop.f32.mrb[0].mxu0
        %385 = vmatprep.mubr.f32.mxu0 0.0
        %386 = vmatmul.mubr.f32.gmra.mrb[0].mxu0 %v293
        %v387 = vpop.f32.mrb[0].mxu0
        %v388 = vadd.f32 0.0, %v387
        %v389 = vpop.f32.mrb[0].mxu0
        %390 = vmatprep.mubr.f32.mxu0 0.0
        %391 = vmatmul.mubr.f32.gmra.mrb[0].mxu0 %v296
        %v392 = vpop.f32.mrb[0].mxu0
        %v393 = vadd.f32 0.0, %v392
        %v394 = vpop.f32.mrb[0].mxu0
        %395 = vmatprep.mubr.f32.mxu0 0.0
        %396 = vmatmul.mubr.f32.gmra.mrb[0].mxu0 %v299
        %v397 = vpop.f32.mrb[0].mxu0
        %v398 = vadd.f32 0.0, %v397
        %v399 = vpop.f32.mrb[0].mxu0
        %400 = vmatprep.mubr.f32.mxu0 0.0
        %401 = vmatmul.mubr.f32.gmra.mrb[0].mxu0 %v302
        %v402 = vpop.f32.mrb[0].mxu0
        %v403 = vadd.f32 0.0, %v402
        %v404 = vpop.f32.mrb[0].mxu0
        %405 = vmatprep.mubr.f32.mxu0 0.0
        %406 = vmatmul.mubr.f32.gmra.mrb[0].mxu0 %v305
        %v407 = vpop.f32.mrb[0].mxu0
        %v408 = vadd.f32 0.0, %v407
        %v409 = vpop.f32.mrb[0].mxu0
        %410 = vmatprep.mubr.f32.mxu0 0.0
        %411 = vmatmul.mubr.f32.gmra.mrb[0].mxu0 %v308
        %v412 = vpop.f32.mrb[0].mxu0
        %v413 = vadd.f32 0.0, %v412
        %v414 = vpop.f32.mrb[0].mxu0
        %415 = vmatprep.mubr.f32.mxu0 0.0
        %416 = vmatmul.mubr.f32.gmra.mrb[0].mxu0 %v311
        %v417 = vpop.f32.mrb[0].mxu0
        %v418 = vadd.f32 0.0, %v417
        %v419 = vpop.f32.mrb[0].mxu0
        %420 = vmatprep.mubr.f32.mxu0 0.0
        %421 = vmatmul.mubr.f32.gmra.mrb[0].mxu0 %v314
        %v422 = vpop.f32.mrb[0].mxu0
        %v423 = vadd.f32 0.0, %v422
        %v424 = vpop.f32.mrb[0].mxu0
        %425 = vdwg.mxu0
        %v426 = vld [vmem:[%s2] sm:$0xff]
        %v427 = vld [vmem:[%s2 + $0x8] sm:$0xff]
        %v428 = vld [vmem:[%s2 + $0x10] sm:$0xff]
        %v429 = vld [vmem:[%s2 + $0x18] sm:$0xff]
        %v430 = vld [vmem:[%s2 + $0x20] sm:$0xff]
        %v431 = vld [vmem:[%s2 + $0x28] sm:$0xff]
        %v432 = vld [vmem:[%s2 + $0x30] sm:$0xff]
        %v433 = vld [vmem:[%s2 + $0x38] sm:$0xff]
        %435 = vset.pattern.permute.xlu0 0
        %436 = vperm.xlu0 %435, %v426
        %v437 = vpop.permute.xlu0 %436
        %440 = vset.pattern.permute.xlu0 0
        %441 = vperm.xlu0 %440, %v427
        %v442 = vpop.permute.xlu0 %441
        %445 = vset.pattern.permute.xlu0 0
        %446 = vperm.xlu0 %445, %v428
        %v447 = vpop.permute.xlu0 %446
        %450 = vset.pattern.permute.xlu0 0
        %451 = vperm.xlu0 %450, %v429
        %v452 = vpop.permute.xlu0 %451
        %455 = vset.pattern.permute.xlu0 0
        %456 = vperm.xlu0 %455, %v430
        %v457 = vpop.permute.xlu0 %456
        %460 = vset.pattern.permute.xlu0 0
        %461 = vperm.xlu0 %460, %v431
        %v462 = vpop.permute.xlu0 %461
        %465 = vset.pattern.permute.xlu0 0
        %466 = vperm.xlu0 %465, %v432
        %v467 = vpop.permute.xlu0 %466
        %470 = vset.pattern.permute.xlu0 0
        %471 = vperm.xlu0 %470, %v433
        %v472 = vpop.permute.xlu0 %471
        %v474 = vadd.f32 %v383, %v437
        %v475 = vadd.f32 %v388, %v442
        %v476 = vadd.f32 %v393, %v447
        %v477 = vadd.f32 %v398, %v452
        %v478 = vadd.f32 %v403, %v457
        %v479 = vadd.f32 %v408, %v462
        %v480 = vadd.f32 %v413, %v467
        %v481 = vadd.f32 %v418, %v472
        %vm482 = vcmp.gt.f32.partialorder %v474, 0.0
        %vm483 = vcmp.gt.f32.partialorder %v475, 0.0
        %vm484 = vcmp.gt.f32.partialorder %v476, 0.0
        %vm485 = vcmp.gt.f32.partialorder %v477, 0.0
        %vm486 = vcmp.gt.f32.partialorder %v478, 0.0
        %vm487 = vcmp.gt.f32.partialorder %v479, 0.0
        %vm488 = vcmp.gt.f32.partialorder %v480, 0.0
        %vm489 = vcmp.gt.f32.partialorder %v481, 0.0
        %v490 = vmul.f32 %v474, 0.1
        %v491 = vmul.f32 %v475, 0.1
        %v492 = vmul.f32 %v476, 0.1
        %v493 = vmul.f32 %v477, 0.1
        %v494 = vmul.f32 %v478, 0.1
        %v495 = vmul.f32 %v479, 0.1
        %v496 = vmul.f32 %v480, 0.1
        %v497 = vmul.f32 %v481, 0.1
        %v498 = vsel %vm482, %v474, %v490
        %v499 = vsel %vm483, %v475, %v491
        %v500 = vsel %vm484, %v476, %v492
        %v501 = vsel %vm485, %v477, %v493
        %v502 = vsel %vm486, %v478, %v494
        %v503 = vsel %vm487, %v479, %v495
        %v504 = vsel %vm488, %v480, %v496
        %v505 = vsel %vm489, %v481, %v497
        %506 = vst.msk [vmem:[#allocation3] sm:$0xff] %vm253, %v498
        %507 = vst.msk [vmem:[#allocation3 + $0x8] sm:$0xff] %vm253, %v499
        %508 = vst.msk [vmem:[#allocation3 + $0x10] sm:$0xff] %vm253, %v500
        %509 = vst.msk [vmem:[#allocation3 + $0x18] sm:$0xff] %vm253, %v501
        %510 = vst.msk [vmem:[#allocation3 + $0x20] sm:$0xff] %vm253, %v502
        %511 = vst.msk [vmem:[#allocation3 + $0x28] sm:$0xff] %vm253, %v503
        %512 = vst.msk [vmem:[#allocation3 + $0x30] sm:$0xff] %vm253, %v504
        %513 = vst.msk [vmem:[#allocation3 + $0x38] sm:$0xff] %vm253, %v505
        %v514 = vld [vmem:[#allocation3] sm:$0xff]
        %v515 = vld [vmem:[#allocation3 + $0x8] sm:$0xff]
        %v516 = vld [vmem:[#allocation3 + $0x10] sm:$0xff]
        %v517 = vld [vmem:[#allocation3 + $0x18] sm:$0xff]
        %v518 = vld [vmem:[#allocation3 + $0x20] sm:$0xff]
        %v519 = vld [vmem:[#allocation3 + $0x28] sm:$0xff]
        %v520 = vld [vmem:[#allocation3 + $0x30] sm:$0xff]
        %v521 = vld [vmem:[#allocation3 + $0x38] sm:$0xff]
        %524 = vrot.lane.b32.xlu0 %v514, 127
        %v525 = vpop.permute.xlu0 %524
        %526 = vrot.lane.b32.xlu0 %v515, 127
        %v527 = vpop.permute.xlu0 %526
        %532 = vrot.lane.b32.xlu0 %v516, 15
        %v533 = vpop.permute.xlu0 %532
        %534 = vrot.lane.b32.xlu0 %v517, 15
        %v535 = vpop.permute.xlu0 %534
        %540 = vrot.lane.b32.xlu0 %v518, 31
        %v541 = vpop.permute.xlu0 %540
        %542 = vrot.lane.b32.xlu0 %v519, 31
        %v543 = vpop.permute.xlu0 %542
        %548 = vrot.lane.b32.xlu0 %v520, 47
        %v549 = vpop.permute.xlu0 %548
        %550 = vrot.lane.b32.xlu0 %v521, 47
        %v551 = vpop.permute.xlu0 %550
        %vm554 = vcmask 130048
        %v555 = vsel %vm554, %v525, %v533
        %v556 = vsel %vm554, %v527, %v535
        %vm557 = vcmask 261120
        %v558 = vsel %vm557, %v555, %v541
        %v559 = vsel %vm557, %v556, %v543
        %v560 = vsel %vm288, %v558, %v549
        %v561 = vsel %vm288, %v559, %v551
        %vm562 = vcmask 523264
        %563 = vst.msk [vmem:[#allocation4 + $0x10] sm:$0xff] %vm562, %v560
        %564 = vst.msk [vmem:[#allocation4 + $0x18] sm:$0xff] %vm562, %v561
        %v565 = vld [vmem:[#allocation3 + $0x30] sm:$0xff]
        %v566 = vld [vmem:[#allocation3 + $0x38] sm:$0xff]
        %567 = vrot.lane.b32.xlu0 %v514, 15
        %v568 = vpop.permute.xlu0 %567
        %569 = vrot.lane.b32.xlu0 %v515, 15
        %v570 = vpop.permute.xlu0 %569
        %573 = vrot.lane.b32.xlu0 %v516, 31
        %v574 = vpop.permute.xlu0 %573
        %575 = vrot.lane.b32.xlu0 %v517, 31
        %v576 = vpop.permute.xlu0 %575
        %579 = vrot.lane.b32.xlu0 %v518, 47
        %v580 = vpop.permute.xlu0 %579
        %581 = vrot.lane.b32.xlu0 %v519, 47
        %v582 = vpop.permute.xlu0 %581
        %v585 = vsel %vm554, %v565, %v568
        %v586 = vsel %vm554, %v566, %v570
        %v587 = vsel %vm557, %v585, %v574
        %v588 = vsel %vm557, %v586, %v576
        %v589 = vsel %vm288, %v587, %v580
        %v590 = vsel %vm288, %v588, %v582
        %591 = vst.msk [vmem:[#allocation4] sm:$0xff] %vm562, %v589
        %592 = vst.msk [vmem:[#allocation4 + $0x8] sm:$0xff] %vm562, %v590
        %v593 = vld [vmem:[#allocation3] sm:$0xff]
        %v594 = vld [vmem:[#allocation3 + $0x8] sm:$0xff]
        %595 = vrot.lane.b32.xlu0 %v516, 127
        %v596 = vpop.permute.xlu0 %595
        %597 = vrot.lane.b32.xlu0 %v517, 127
        %v598 = vpop.permute.xlu0 %597
        %601 = vrot.lane.b32.xlu0 %v518, 15
        %v602 = vpop.permute.xlu0 %601
        %603 = vrot.lane.b32.xlu0 %v519, 15
        %v604 = vpop.permute.xlu0 %603
        %607 = vrot.lane.b32.xlu0 %v520, 31
        %v608 = vpop.permute.xlu0 %607
        %609 = vrot.lane.b32.xlu0 %v521, 31
        %v610 = vpop.permute.xlu0 %609
        %615 = vrot.lane.b32.xlu0 %v593, 46
        %v616 = vpop.permute.xlu0 %615
        %617 = vrot.lane.b32.xlu0 %v594, 46
        %v618 = vpop.permute.xlu0 %617
        %v621 = vsel %vm554, %v596, %v602
        %v622 = vsel %vm554, %v598, %v604
        %v623 = vsel %vm557, %v621, %v608
        %v624 = vsel %vm557, %v622, %v610
        %v625 = vsel %vm288, %v623, %v616
        %v626 = vsel %vm288, %v624, %v618
        %627 = vst.msk [vmem:[#allocation4 + $0x20] sm:$0xff] %vm562, %v625
        %628 = vst.msk [vmem:[#allocation4 + $0x28] sm:$0xff] %vm562, %v626
        %p629 = scmp.eq.s32.totalorder %s24, 0
        // Predicated region
        $region41: #{tpu_custom_call.1} parent=39 // pred_check
          %p630 = pneg %p629
        $region42: #{tpu_custom_call.1} parent=39 // pred_check_branch
          %632 = sbr.rel (%p630) target = $region44
        $region43: #{tpu_custom_call.1} parent=39 // pred_region
          %vm633 = vcmask 7168
          %634 = vst.msk [vmem:[#allocation4] sm:$0xff] %vm633, 0.0
          %635 = vst.msk [vmem:[#allocation4 + $0x8] sm:$0xff] %vm633, 0.0
          %vm636 = vcmask 523768
          %637 = vst.msk [vmem:[#allocation4 + $0x20] sm:$0xff] %vm636, 0.0
          %638 = vst.msk [vmem:[#allocation4 + $0x28] sm:$0xff] %vm636, 0.0
        $region44: #{tpu_custom_call.1} parent=39 // pred_fallthru
          _
        %v639 = vld [vmem:[%s3] sm:$0xff]
        %v640 = vld [vmem:[#allocation4] sm:$0xff]
        %v641 = vld [vmem:[#allocation4 + $0x8] sm:$0xff]
        %v642 = vld [vmem:[#allocation4 + $0x10] sm:$0xff]
        %v643 = vld [vmem:[#allocation4 + $0x18] sm:$0xff]
        %v644 = vld [vmem:[#allocation4 + $0x20] sm:$0xff]
        %v645 = vld [vmem:[#allocation4 + $0x28] sm:$0xff]
        %647 = vrot.lane.b32.xlu0 %v423, 127
        %v648 = vpop.permute.xlu0 %647
        %650 = vrot.lane.b32.xlu0 %v423, 15
        %v651 = vpop.permute.xlu0 %650
        %653 = vrot.lane.b32.xlu0 %v423, 31
        %v654 = vpop.permute.xlu0 %653
        %656 = vrot.lane.b32.xlu0 %v423, 47
        %v657 = vpop.permute.xlu0 %656
        %v659 = vsel %vm554, %v648, %v651
        %v660 = vsel %vm557, %v659, %v654
        %v661 = vsel %vm288, %v660, %v657
        %v663 = vsel %vm288, %v639, 0
        %665 = vmatprep.subr.mxu0 0.0
        %666 = vmatpush1.msra.mxu0 %v640
        %667 = vmatprep.subr.mxu0 0.0
        %668 = vmatpush1.msra.mxu0 %v641
        %669 = vmatprep.subr.mxu0 0.0
        %670 = vmatpush1.msra.mxu0 %v642
        %671 = vmatprep.subr.mxu0 0.0
        %672 = vmatpush1.msra.mxu0 %v643
        %673 = vmatprep.subr.mxu0 0.0
        %674 = vmatpush1.msra.mxu0 %v644
        %675 = vmatprep.subr.mxu0 0.0
        %676 = vmatpush1.msra.mxu0 %v645
        %677 = vmatprep.subr.mxu0 0.0
        %678 = vmatpush1.msra.mxu0 0.0
        %679 = vmatprep.subr.mxu0 0.0
        %680 = vmatpush1.msra.mxu0 0.0
        %681 = vmatprep.subr.mxu0 0.0
        %682 = vmatpush1.msra.mxu0 0.0
        %683 = vmatprep.subr.mxu0 0.0
        %684 = vmatpush1.msra.mxu0 0.0
        %685 = vmatprep.subr.mxu0 0.0
        %686 = vmatpush1.msra.mxu0 0.0
        %687 = vmatprep.subr.mxu0 0.0
        %688 = vmatpush1.msra.mxu0 0.0
        %689 = vmatprep.subr.mxu0 0.0
        %690 = vmatpush1.msra.mxu0 0.0
        %691 = vmatprep.subr.mxu0 0.0
        %692 = vmatpush1.msra.mxu0 0.0
        %693 = vmatprep.subr.mxu0 0.0
        %694 = vmatpush1.msra.mxu0 0.0
        %695 = vmatprep.subr.mxu0 0.0
        %696 = vmatpush1.msra.mxu0 0.0
        %697 = vmatprep.subr.mxu0 0.0
        %698 = vmatpush1.msra.mxu0 0.0
        %699 = vmatprep.subr.mxu0 0.0
        %700 = vmatpush1.msra.mxu0 0.0
        %701 = vmatprep.subr.mxu0 0.0
        %702 = vmatpush1.msra.mxu0 0.0
        %703 = vmatprep.subr.mxu0 0.0
        %704 = vmatpush1.msra.mxu0 0.0
        %705 = vmatprep.subr.mxu0 0.0
        %706 = vmatpush1.msra.mxu0 0.0
        %707 = vmatprep.subr.mxu0 0.0
        %708 = vmatpush1.msra.mxu0 0.0
        %709 = vmatprep.subr.mxu0 0.0
        %710 = vmatpush1.msra.mxu0 0.0
        %711 = vmatprep.subr.mxu0 0.0
        %712 = vmatpush1.msra.mxu0 0.0
        %713 = vmatprep.subr.mxu0 0.0
        %714 = vmatpush1.msra.mxu0 0.0
        %715 = vmatprep.subr.mxu0 0.0
        %716 = vmatpush1.msra.mxu0 0.0
        %717 = vmatprep.subr.mxu0 0.0
        %718 = vmatpush1.msra.mxu0 0.0
        %719 = vmatprep.subr.mxu0 0.0
        %720 = vmatpush1.msra.mxu0 0.0
        %721 = vmatprep.subr.mxu0 0.0
        %722 = vmatpush1.msra.mxu0 0.0
        %723 = vmatprep.subr.mxu0 0.0
        %724 = vmatpush1.msra.mxu0 0.0
        %725 = vmatprep.subr.mxu0 0.0
        %726 = vmatpush1.msra.mxu0 0.0
        %727 = vmatprep.subr.mxu0 0.0
        %728 = vmatpush1.msra.mxu0 0.0
        %729 = vmatprep.mubr.f32.mxu0 0.0
        %730 = vmatmul.mubr.f32.gmra.mrb[0].mxu0 %v663
        %v731 = vpop.f32.mrb[0].mxu0
        %v732 = vadd.f32 %v661, %v731
        %v733 = vpop.f32.mrb[0].mxu0
        %734 = vdwg.mxu0
        %v735 = vld [vmem:[%s4] sm:$0xff]
        %737 = vset.pattern.permute.xlu0 0
        %738 = vperm.xlu0 %737, %v735
        %v739 = vpop.permute.xlu0 %738
        %v741 = vadd.f32 %v732, %v739
        %742 = vst.msk [vmem:[%s237] sm:$0xff] %vm562, %v741
        %s743 = sand.u32 %s153, 1
        %s744 = scalar_lea.sflag [#allocation6], %s743
        %s745 = sand.u32 %s153, 1
        %s746 = smul.addr %s745, 8
        %s747 = scalar_lea.vmem [#allocation5], %s746
        // Predicated region
        $region45: #{tpu_custom_call.1} parent=39 // pred_check
          %p748 = pneg %p163
        $region46: #{tpu_custom_call.1} parent=39 // pred_check_branch
          %750 = sbr.rel (%p748) target = $region48
        $region47: #{tpu_custom_call.1} parent=39 // pred_region
          %s752 = ssub.s32 128, 128
          %753 = vsyncadd %s744, %s752
          %s754 = sadd.s32 %s24, %s23
          %s755 = smul.addr %s754, 128
          %s756 = scalar_lea.hbm %s5, %s755
          %s758 = sshll.u32 %s747, 4
          %s759 = int_to_ptr.vmem [resolvable:$true] %s758
          %761 = dma.vmem_to_hbm [thread:$0]  %s759, 128, %s756, %s744
        $region48: #{tpu_custom_call.1} parent=39 // pred_fallthru
          _
      $region40: #{tpu_custom_call.1} parent=5 // pred_fallthru
        _
      %p762 = scmp.le.s32.totalorder 2, %s14
      // Predicated region
      $region49: #{tpu_custom_call.1} parent=5 // pred_check
        %p763 = pneg %p762
      $region50: #{tpu_custom_call.1} parent=5 // pred_check_branch
        %765 = sbr.rel (%p763) target = $region52
      $region51: #{tpu_custom_call.1} parent=5 // pred_region
        %s766 = ssub.s32 %s14, 2
        // Predicated region
        $region53: #{tpu_custom_call.1} parent=51 // pred_check
          %p767 = pneg %p169
        $region54: #{tpu_custom_call.1} parent=51 // pred_check_branch
          %769 = sbr.rel (%p767) target = $region56
        $region55: #{tpu_custom_call.1} parent=51 // pred_region
          %s770 = sand.u32 %s154, 1
          %s771 = scalar_lea.sflag [#allocation6], %s770
          %s772 = sand.u32 %s154, 1
          %s773 = smul.addr %s772, 8
          %s774 = scalar_lea.vmem [#allocation5], %s773
          %775 = dma.done %s771, 128
        $region56: #{tpu_custom_call.1} parent=51 // pred_fallthru
          _
      $region52: #{tpu_custom_call.1} parent=5 // pred_fallthru
        _
    $region6: #{tpu_custom_call.1} parent=1 // loop_footer
      %s18 = sadd.s32 1, %s14
    $region7: #{tpu_custom_call.1} parent=1 // loop_footer_branch
      %13 = sbr.rel target = $region3
    $region8: #{tpu_custom_call.1} parent=1 // loop_exit
      _
    %776 = vsyncpa [#allocation6], 1
    %s777 = scalar_lea.sflag [#allocation6], 1
    %778 = vsyncpa %s777, 1

</llo_original>
